<compile_context>
chip_gen: v6e
topology: v6e:2x2x1
jax: 0.10.0
libtpu: 0.0.40
codegen_flags: <defaults>
</compile_context>

<pallas_src>
import math
import jax
import jax.numpy as jnp
from jax import lax
from jax.experimental import pallas as pl
from jax.experimental.pallas import tpu as pltpu


def _round_up(x: int, m: int) -> int:
    return ((x + m - 1) // m) * m


def _make_lm_head_kernel(eps: float):
    inv_sqrt2 = 1.0 / math.sqrt(2.0)

    def kernel(x_ref, wd_ref, bd_ref, g_ref, beta_ref, wdec_ref, bias_ref,
               o_ref, h_scratch):
        # The hidden state (dense + gelu + LayerNorm) depends only on the token
        # tile, so compute it once per token tile (vocab-grid index j == 0) and
        # reuse it for every vocab tile.  Correct only while the vocab axis is
        # the innermost, in-order ("arbitrary") grid axis.
        @pl.when(pl.program_id(1) == 0)
        def _():
            # dense: bf16 x bf16 on the MXU, f32 accumulation
            h = jnp.dot(x_ref[...], wd_ref[...],
                        preferred_element_type=jnp.float32) + bd_ref[...]
            # exact (erf-based) gelu, matching transformers' `gelu`, in f32
            h = 0.5 * h * (1.0 + lax.erf(h * inv_sqrt2))
            # BertLayerNorm over the hidden (last) dim, f32 statistics
            mu = jnp.mean(h, axis=-1, keepdims=True)
            var = jnp.mean((h - mu) * (h - mu), axis=-1, keepdims=True)
            inv = lax.rsqrt(var + eps)
            h = (h - mu) * (g_ref[...] * inv) + beta_ref[...]
            # store the hidden state in the MXU compute dtype (bf16)
            h_scratch[...] = h.astype(h_scratch.dtype)

        # decoder matmul for this (token tile, vocab tile) + bias, f32 accum
        o_ref[...] = (jnp.dot(h_scratch[...], wdec_ref[...],
                              preferred_element_type=jnp.float32)
                      + bias_ref[...]).astype(o_ref.dtype)

    return kernel


def roberta_lm_head(features, w_dense, b_dense, gamma, beta, w_dec, bias, *,
                    eps=1e-12, tm=256, tn=512, use_bf16=True,
                    out_dtype=jnp.float32):
    """features: [B, S, H] -> logits [B, S, V].

    Linear weights are stored as (in_features, out_features), i.e. already
    transposed relative to PyTorch's nn.Linear.weight.
    """
    B, S, H = features.shape
    V = w_dec.shape[1]
    N = B * S

    # Clamp tiles to the (padded) problem size; tm multiple of 8, tn of 128.
    tm = _round_up(max(8, min(tm, _round_up(N, 8))), 8)
    tn = _round_up(max(128, min(tn, _round_up(V, 128))), 128)
    n_pad = _round_up(N, tm)
    v_pad = _round_up(V, tn)

    compute_dtype = jnp.bfloat16 if use_bf16 else jnp.float32

    # Token-major 2-D slab, cast to the MXU compute dtype, zero-pad tokens.
    x2d = features.reshape(N, H).astype(compute_dtype)
    if n_pad != N:
        x2d = jnp.pad(x2d, ((0, n_pad - N), (0, 0)))

    wd = w_dense.astype(compute_dtype)
    wdec = w_dec.astype(compute_dtype)
    bias_p = bias.astype(jnp.float32)
    if v_pad != V:
        wdec = jnp.pad(wdec, ((0, 0), (0, v_pad - V)))
        bias_p = jnp.pad(bias_p, ((0, v_pad - V),))

    b_dense2 = b_dense.reshape(1, H).astype(jnp.float32)
    gamma2 = gamma.reshape(1, H).astype(jnp.float32)
    beta2 = beta.reshape(1, H).astype(jnp.float32)
    bias2 = bias_p.reshape(1, v_pad)

    grid = (n_pad // tm, v_pad // tn)

    # Rough double-buffered VMEM footprint for this tile plan; use it to set an
    # explicit scoped-VMEM limit (v7x only has 64 MiB physical per TC, while
    # v5e/v6e benefit from a limit above the 16/32 MiB defaults).
    esz = jnp.dtype(compute_dtype).itemsize
    osz = jnp.dtype(out_dtype).itemsize
    vmem_est = (2 * tm * H * esz            # x tile (double buffered)
                + 2 * H * H * esz           # W_dense
                + 2 * H * tn * esz          # W_decoder tile
                + 2 * tm * tn * osz         # output tile
                + tm * H * esz              # h_scratch
                + 8 * (H + v_pad) * 4)      # small vectors
    vmem_limit = int(min(96 * 1024 * 1024,
                         max(32 * 1024 * 1024, 2 * vmem_est)))

    out2d = pl.pallas_call(
        _make_lm_head_kernel(float(eps)),
        out_shape=jax.ShapeDtypeStruct((n_pad, v_pad), out_dtype),
        grid_spec=pltpu.PrefetchScalarGridSpec(
            num_scalar_prefetch=0,
            grid=grid,
            in_specs=[
                pl.BlockSpec((tm, H), lambda i, j: (i, 0)),   # x tile
                pl.BlockSpec((H, H), lambda i, j: (0, 0)),    # W_dense (full)
                pl.BlockSpec((1, H), lambda i, j: (0, 0)),    # b_dense
                pl.BlockSpec((1, H), lambda i, j: (0, 0)),    # LN gamma
                pl.BlockSpec((1, H), lambda i, j: (0, 0)),    # LN beta
                pl.BlockSpec((H, tn), lambda i, j: (0, j)),   # W_decoder tile
                pl.BlockSpec((1, tn), lambda i, j: (0, j)),   # decoder bias
            ],
            out_specs=pl.BlockSpec((tm, tn), lambda i, j: (i, j)),
            scratch_shapes=[pltpu.VMEM((tm, H), compute_dtype)],
        ),
        compiler_params=pltpu.CompilerParams(
            dimension_semantics=("parallel", "arbitrary"),
            vmem_limit_bytes=vmem_limit),
    )(x2d, wd, b_dense2, gamma2, beta2, wdec, bias2)

    return out2d[:N, :V].reshape(B, S, V)


def _reference(features, w_dense, b_dense, gamma, beta, w_dec, bias,
               eps=1e-12, use_bf16=True):
    """Pure-JAX reference mirroring the kernel's precision choices."""
    cd = jnp.bfloat16 if use_bf16 else jnp.float32
    x = features.astype(cd).astype(jnp.float32)
    wd = w_dense.astype(cd).astype(jnp.float32)
    h = x @ wd + b_dense
    h = 0.5 * h * (1.0 + lax.erf(h * (1.0 / math.sqrt(2.0))))
    mu = jnp.mean(h, axis=-1, keepdims=True)
    var = jnp.mean((h - mu) ** 2, axis=-1, keepdims=True)
    h = (h - mu) / jnp.sqrt(var + eps)
    h = h * gamma + beta
    h = h.astype(cd).astype(jnp.float32)
    wdec = w_dec.astype(cd).astype(jnp.float32)
    return h @ wdec + bias


def _reference_f32(features, w_dense, b_dense, gamma, beta, w_dec, bias,
                   eps=1e-12):
    """Full-precision reference (exact module semantics)."""
    h = features @ w_dense + b_dense
    h = 0.5 * h * (1.0 + lax.erf(h / jnp.sqrt(jnp.float32(2.0))))
    mu = jnp.mean(h, axis=-1, keepdims=True)
    var = jnp.mean((h - mu) ** 2, axis=-1, keepdims=True)
    h = (h - mu) / jnp.sqrt(var + eps)
    h = h * gamma + beta
    return h @ w_dec + bias


if __name__ == "__main__":
    # Small config consistent with the module: hidden_size=128, vocab_size=256
    B, S, H, V = 2, 8, 128, 256
    eps = 1e-12

    key = jax.random.PRNGKey(0)
    k1, k2, k3, k4 = jax.random.split(key, 4)

    features = jax.random.normal(k1, (B, S, H), dtype=jnp.float32)

    # Deterministic parameter init (weights stored as (in, out))
    w_dense = jax.random.normal(k2, (H, H), dtype=jnp.float32) * 0.02
    b_dense = jnp.zeros((H,), dtype=jnp.float32)
    gamma = jnp.ones((H,), dtype=jnp.float32)
    beta = jnp.zeros((H,), dtype=jnp.float32)
    w_dec = jax.random.normal(k3, (H, V), dtype=jnp.float32) * 0.02
    bias = jax.random.normal(k4, (V,), dtype=jnp.float32) * 0.01

    out = roberta_lm_head(features, w_dense, b_dense, gamma, beta, w_dec, bias,
                          eps=eps)
    out = jax.block_until_ready(out)
    assert out.shape == (B, S, V)
    assert jnp.all(jnp.isfinite(out)), "non-finite logits"

    # Tight check against a reference that uses the same bf16-in / f32-accum
    # precision as the kernel.
    ref_bf16 = _reference(features, w_dense, b_dense, gamma, beta, w_dec, bias,
                          eps=eps, use_bf16=True)
    assert jnp.allclose(out, ref_bf16, atol=2e-3, rtol=2e-3), \
        "mismatch vs bf16-matched reference"

    # Looser sanity check against the full-f32 module semantics.
    ref_f32 = _reference_f32(features, w_dense, b_dense, gamma, beta, w_dec,
                             bias, eps=eps)
    assert jnp.allclose(out, ref_f32, atol=2e-2, rtol=2e-2), \
        "mismatch vs f32 reference"

    print("KERNEL_OK")
</pallas_src>

<mosaic_0001>
module attributes {stable_mosaic.version = 11 : i64} {
  func.func @kernel(%arg0: i32, %arg1: i32, %arg2: memref<16x128xbf16, #tpu.memory_space<vmem>>, %arg3: memref<128x128xbf16, #tpu.memory_space<vmem>>, %arg4: memref<1x128xf32, #tpu.memory_space<vmem>>, %arg5: memref<1x128xf32, #tpu.memory_space<vmem>>, %arg6: memref<1x128xf32, #tpu.memory_space<vmem>>, %arg7: memref<128x256xbf16, #tpu.memory_space<vmem>>, %arg8: memref<1x256xf32, #tpu.memory_space<vmem>>, %arg9: memref<16x256xf32, #tpu.memory_space<vmem>>, %arg10: memref<16x128xbf16, #tpu.memory_space<vmem>>) attributes {dimension_semantics = [#tpu.dimension_semantics<parallel>, #tpu.dimension_semantics<arbitrary>], iteration_bounds = array<i64: 1, 1>, scalar_prefetch = 0 : i64, scratch_operands = 1 : i64, tpu.core_type = #tpu.core_type<tc>, window_params = [{transform_indices = @transform_0, window_bounds = array<i64: 16, 128>}, {pipeline_mode = #tpu.pipeline_mode<synchronous>, transform_indices = @transform_1, window_bounds = array<i64: 128, 128>}, {pipeline_mode = #tpu.pipeline_mode<synchronous>, transform_indices = @transform_2, window_bounds = array<i64: 1, 128>}, {pipeline_mode = #tpu.pipeline_mode<synchronous>, transform_indices = @transform_3, window_bounds = array<i64: 1, 128>}, {pipeline_mode = #tpu.pipeline_mode<synchronous>, transform_indices = @transform_4, window_bounds = array<i64: 1, 128>}, {transform_indices = @transform_5, window_bounds = array<i64: 128, 256>}, {transform_indices = @transform_6, window_bounds = array<i64: 1, 256>}, {transform_indices = @transform_7, window_bounds = array<i64: 16, 256>}]} {
    %c0_i32 = arith.constant 0 : i32
    %0 = arith.cmpi eq, %arg1, %c0_i32 : i32
    %1 = arith.extui %0 : i1 to i32
    %c0_i32_0 = arith.constant 0 : i32
    %2 = arith.cmpi ne, %1, %c0_i32_0 : i32
    scf.if %2 {
      %c0_8 = arith.constant 0 : index
      %c0_9 = arith.constant 0 : index
      %10 = vector.load %arg2[%c0_8, %c0_9] : memref<16x128xbf16, #tpu.memory_space<vmem>>, vector<16x128xbf16>
      %c0_10 = arith.constant 0 : index
      %c0_11 = arith.constant 0 : index
      %11 = vector.load %arg3[%c0_10, %c0_11] : memref<128x128xbf16, #tpu.memory_space<vmem>>, vector<128x128xbf16>
      %cst_12 = arith.constant dense<0.000000e+00> : vector<16x128xf32>
      %12 = tpu.matmul %10, %11, %cst_12 {dimension_numbers = #tpu.dot_dimension_numbers<[1], [0], [0], [1], [0, 0, 1, 1], [], []>} : vector<16x128xbf16>, vector<128x128xbf16>, vector<16x128xf32> -> vector<16x128xf32>
      %c0_13 = arith.constant 0 : index
      %c0_14 = arith.constant 0 : index
      %13 = vector.load %arg4[%c0_13, %c0_14] : memref<1x128xf32, #tpu.memory_space<vmem>>, vector<1x128xf32>
      %14 = vector.broadcast %13 : vector<1x128xf32> to vector<16x128xf32>
      %15 = arith.addf %12, %14 : vector<16x128xf32>
      %cst_15 = arith.constant 5.000000e-01 : f32
      %16 = vector.broadcast %cst_15 : f32 to vector<16x128xf32>
      %17 = arith.mulf %16, %15 : vector<16x128xf32>
      %cst_16 = arith.constant 0.707106769 : f32
      %18 = vector.broadcast %cst_16 : f32 to vector<16x128xf32>
      %19 = arith.mulf %15, %18 : vector<16x128xf32>
      %20 = math.erf %19 : vector<16x128xf32>
      %cst_17 = arith.constant 1.000000e+00 : f32
      %21 = vector.broadcast %cst_17 : f32 to vector<16x128xf32>
      %22 = arith.addf %21, %20 : vector<16x128xf32>
      %23 = arith.mulf %17, %22 : vector<16x128xf32>
      %cst_18 = arith.constant dense<0.000000e+00> : vector<16xf32>
      %24 = vector.multi_reduction <add>, %23, %cst_18 [1] : vector<16x128xf32> to vector<16xf32>
      %25 = vector.shape_cast %24 : vector<16xf32> to vector<16x1xf32>
      %cst_19 = arith.constant 1.280000e+02 : f32
      %26 = vector.broadcast %cst_19 : f32 to vector<16x1xf32>
      %27 = arith.divf %25, %26 : vector<16x1xf32>
      %28 = vector.broadcast %27 : vector<16x1xf32> to vector<16x128xf32>
      %29 = arith.subf %23, %28 : vector<16x128xf32>
      %30 = vector.broadcast %27 : vector<16x1xf32> to vector<16x128xf32>
      %31 = arith.subf %23, %30 : vector<16x128xf32>
      %32 = arith.mulf %29, %31 : vector<16x128xf32>
      %cst_20 = arith.constant dense<0.000000e+00> : vector<16xf32>
      %33 = vector.multi_reduction <add>, %32, %cst_20 [1] : vector<16x128xf32> to vector<16xf32>
      %34 = vector.shape_cast %33 : vector<16xf32> to vector<16x1xf32>
      %cst_21 = arith.constant 1.280000e+02 : f32
      %35 = vector.broadcast %cst_21 : f32 to vector<16x1xf32>
      %36 = arith.divf %34, %35 : vector<16x1xf32>
      %cst_22 = arith.constant 9.99999996E-13 : f32
      %37 = vector.broadcast %cst_22 : f32 to vector<16x1xf32>
      %38 = arith.addf %36, %37 : vector<16x1xf32>
      %39 = math.rsqrt %38 : vector<16x1xf32>
      %40 = vector.broadcast %27 : vector<16x1xf32> to vector<16x128xf32>
      %41 = arith.subf %23, %40 : vector<16x128xf32>
      %c0_23 = arith.constant 0 : index
      %c0_24 = arith.constant 0 : index
      %42 = vector.load %arg5[%c0_23, %c0_24] : memref<1x128xf32, #tpu.memory_space<vmem>>, vector<1x128xf32>
      %43 = vector.broadcast %42 : vector<1x128xf32> to vector<16x128xf32>
      %44 = vector.broadcast %39 : vector<16x1xf32> to vector<16x128xf32>
      %45 = arith.mulf %43, %44 : vector<16x128xf32>
      %46 = arith.mulf %41, %45 : vector<16x128xf32>
      %c0_25 = arith.constant 0 : index
      %c0_26 = arith.constant 0 : index
      %47 = vector.load %arg6[%c0_25, %c0_26] : memref<1x128xf32, #tpu.memory_space<vmem>>, vector<1x128xf32>
      %48 = vector.broadcast %47 : vector<1x128xf32> to vector<16x128xf32>
      %49 = arith.addf %46, %48 : vector<16x128xf32>
      %50 = arith.truncf %49 : vector<16x128xf32> to vector<16x128xbf16>
      %c0_27 = arith.constant 0 : index
      %c0_28 = arith.constant 0 : index
      %51 = vector.load %arg10[%c0_27, %c0_28] : memref<16x128xbf16, #tpu.memory_space<vmem>>, vector<16x128xbf16>
      tpu.vector_store %arg10[%c0_27, %c0_28], %50 {strides = array<i32>} : memref<16x128xbf16, #tpu.memory_space<vmem>>, vector<16x128xbf16>,
    } else {
    }
    %c0 = arith.constant 0 : index
    %c0_1 = arith.constant 0 : index
    %3 = vector.load %arg10[%c0, %c0_1] : memref<16x128xbf16, #tpu.memory_space<vmem>>, vector<16x128xbf16>
    %c0_2 = arith.constant 0 : index
    %c0_3 = arith.constant 0 : index
    %4 = vector.load %arg7[%c0_2, %c0_3] : memref<128x256xbf16, #tpu.memory_space<vmem>>, vector<128x256xbf16>
    %cst = arith.constant dense<0.000000e+00> : vector<16x256xf32>
    %5 = tpu.matmul %3, %4, %cst {dimension_numbers = #tpu.dot_dimension_numbers<[1], [0], [0], [1], [0, 0, 1, 1], [], []>} : vector<16x128xbf16>, vector<128x256xbf16>, vector<16x256xf32> -> vector<16x256xf32>
    %c0_4 = arith.constant 0 : index
    %c0_5 = arith.constant 0 : index
    %6 = vector.load %arg8[%c0_4, %c0_5] : memref<1x256xf32, #tpu.memory_space<vmem>>, vector<1x256xf32>
    %7 = vector.broadcast %6 : vector<1x256xf32> to vector<16x256xf32>
    %8 = arith.addf %5, %7 : vector<16x256xf32>
    %c0_6 = arith.constant 0 : index
    %c0_7 = arith.constant 0 : index
    %9 = vector.load %arg9[%c0_6, %c0_7] : memref<16x256xf32, #tpu.memory_space<vmem>>, vector<16x256xf32>
    tpu.vector_store %arg9[%c0_6, %c0_7], %8 {strides = array<i32>} : memref<16x256xf32, #tpu.memory_space<vmem>>, vector<16x256xf32>,
    return
  }
  func.func @transform_0(%arg0: i32, %arg1: i32) -> (i32, i32) {
    %c0_i32 = arith.constant 0 : i32
    %c0_i32_0 = arith.constant 0 : i32
    return %arg0, %c0_i32 : i32, i32
  }
  func.func @transform_1(%arg0: i32, %arg1: i32) -> (i32, i32) {
    %c0_i32 = arith.constant 0 : i32
    %c0_i32_0 = arith.constant 0 : i32
    %c0_i32_1 = arith.constant 0 : i32
    return %c0_i32, %c0_i32_0 : i32, i32
  }
  func.func @transform_2(%arg0: i32, %arg1: i32) -> (i32, i32) {
    %c0_i32 = arith.constant 0 : i32
    %c0_i32_0 = arith.constant 0 : i32
    %c0_i32_1 = arith.constant 0 : i32
    return %c0_i32, %c0_i32_0 : i32, i32
  }
  func.func @transform_3(%arg0: i32, %arg1: i32) -> (i32, i32) {
    %c0_i32 = arith.constant 0 : i32
    %c0_i32_0 = arith.constant 0 : i32
    %c0_i32_1 = arith.constant 0 : i32
    return %c0_i32, %c0_i32_0 : i32, i32
  }
  func.func @transform_4(%arg0: i32, %arg1: i32) -> (i32, i32) {
    %c0_i32 = arith.constant 0 : i32
    %c0_i32_0 = arith.constant 0 : i32
    %c0_i32_1 = arith.constant 0 : i32
    return %c0_i32, %c0_i32_0 : i32, i32
  }
  func.func @transform_5(%arg0: i32, %arg1: i32) -> (i32, i32) {
    %c0_i32 = arith.constant 0 : i32
    %c0_i32_0 = arith.constant 0 : i32
    return %c0_i32, %arg1 : i32, i32
  }
  func.func @transform_6(%arg0: i32, %arg1: i32) -> (i32, i32) {
    %c0_i32 = arith.constant 0 : i32
    %c0_i32_0 = arith.constant 0 : i32
    return %c0_i32, %arg1 : i32, i32
  }
  func.func @transform_7(%arg0: i32, %arg1: i32) -> (i32, i32) {
    %c0_i32 = arith.constant 0 : i32
    return %arg0, %arg1 : i32, i32
  }
}

</mosaic_0001>

<llo_original>
// kernel: tpu_custom_call.1
$region0: #{tpu_custom_call.1}
  #allocation0 [shape = 'u32[]', space=smem, size = 0x4, offset = 0x4, fixed_abs, tag = 'smem constant byte address 0x4 - core index']
  #allocation1 [shape = 'u32[144,128]{1,0:T(1,128)}', space=vmem, size = 0x12000, scoped, tag = 'internal scratch']
  #allocation2 [shape = 'bf16[16,128]{1,0:T(8,128)(2,1)}', space=vmem, size = 0x1000, scoped, tag = 'scratch operand']
  %s0 = inlined_call_operand.hbm [shape: bf16[16,128], index: 0, kind: input, shape index: {}]
  %s1 = inlined_call_operand.hbm [shape: bf16[128,128], index: 1, kind: input, shape index: {}]
  %s2 = inlined_call_operand.vmem [shape: f32[1,128], index: 2, kind: input, shape index: {}]
  %s3 = inlined_call_operand.vmem [shape: f32[1,128], index: 3, kind: input, shape index: {}]
  %s4 = inlined_call_operand.vmem [shape: f32[1,128], index: 4, kind: input, shape index: {}]
  %s5 = inlined_call_operand.hbm [shape: bf16[128,256], index: 5, kind: input, shape index: {}]
  %s6 = inlined_call_operand.vmem [shape: f32[1,256], index: 6, kind: input, shape index: {}]
  %s7 = inlined_call_operand.hbm [shape: f32[16,256], index: 7, kind: output, shape index: {}]
  %s8 = sld [smem:[#allocation0]]
  $region54: #{tpu_custom_call.1} parent=0
    _
  %s10 = ssub.s32 1, %s8
  %s11 = scalar_select 0, %s10, %s8
  $region1: #{tpu_custom_call.1} parent=0
    #allocation3 [shape = 'u8[4096]{0}', space=vmem, size = 0x1000, scoped, tag = 'input window, operand 0, single buffered']
    #allocation4 [shape = 's32[1]{0}', space=sflag, size = 0x4, scoped, tag = 'scoped memory for tpu_custom_call.1']
    #allocation5 [shape = 's32[1]{0}', space=sflag, size = 0x4, scoped, tag = 'scoped memory for tpu_custom_call.1']
    #allocation6 [shape = 'u8[32768]{0}', space=vmem, size = 0x8000, scoped, tag = 'input window, operand 1, single buffered']
    #allocation7 [shape = 's32[1]{0}', space=sflag, size = 0x4, scoped, tag = 'scoped memory for tpu_custom_call.1']
    #allocation8 [shape = 'u8[65536]{0}', space=vmem, size = 0x10000, scoped, tag = 'input window, operand 5, single buffered']
    #allocation9 [shape = 'u8[16384]{0}', space=vmem, size = 0x4000, scoped, tag = 'output window, operand 0, single buffered']
    %12 = vsyncpa [#allocation4], 0
    %13 = vsyncpa [#allocation7], 0
    %14 = vsyncpa [#allocation5], 0
    // Predicated region
    $region2: #{tpu_custom_call.1} parent=1 // pred_check
      _
    $region3: #{tpu_custom_call.1} parent=1 // pred_check_branch
      %16 = sbr.rel (0) target = $region5
    $region4: #{tpu_custom_call.1} parent=1 // pred_region
      %s18 = ssub.s32 128, 128
      %19 = vsyncadd [#allocation4], %s18
      %s20 = sshll.u32 [#allocation3], 4
      %s21 = int_to_ptr.vmem [resolvable:$true] %s20
      %26 = dma.hbm_to_vmem [thread:$0]  %s0, 128, %s21, [#allocation4], 64, 64, 4
    $region5: #{tpu_custom_call.1} parent=1 // pred_fallthru
      _
    // Predicated region
    $region6: #{tpu_custom_call.1} parent=1 // pred_check
      _
    $region7: #{tpu_custom_call.1} parent=1 // pred_check_branch
      %28 = sbr.rel (0) target = $region9
    $region8: #{tpu_custom_call.1} parent=1 // pred_region
      %s30 = ssub.s32 1024, 1024
      %31 = vsyncadd [#allocation7], %s30
      %s32 = sshll.u32 [#allocation6], 4
      %s33 = int_to_ptr.vmem [resolvable:$true] %s32
      %38 = dma.hbm_to_vmem [thread:$0]  %s1, 1024, %s33, [#allocation7], 64, 64, 4
    $region9: #{tpu_custom_call.1} parent=1 // pred_fallthru
      _
    // Predicated region
    $region10: #{tpu_custom_call.1} parent=1 // pred_check
      _
    $region11: #{tpu_custom_call.1} parent=1 // pred_check_branch
      %40 = sbr.rel (0) target = $region13
    $region12: #{tpu_custom_call.1} parent=1 // pred_region
      _
    $region13: #{tpu_custom_call.1} parent=1 // pred_fallthru
      _
    // Predicated region
    $region14: #{tpu_custom_call.1} parent=1 // pred_check
      _
    $region15: #{tpu_custom_call.1} parent=1 // pred_check_branch
      %42 = sbr.rel (0) target = $region17
    $region16: #{tpu_custom_call.1} parent=1 // pred_region
      _
    $region17: #{tpu_custom_call.1} parent=1 // pred_fallthru
      _
    // Predicated region
    $region18: #{tpu_custom_call.1} parent=1 // pred_check
      _
    $region19: #{tpu_custom_call.1} parent=1 // pred_check_branch
      %44 = sbr.rel (0) target = $region21
    $region20: #{tpu_custom_call.1} parent=1 // pred_region
      _
    $region21: #{tpu_custom_call.1} parent=1 // pred_fallthru
      _
    // Predicated region
    $region22: #{tpu_custom_call.1} parent=1 // pred_check
      _
    $region23: #{tpu_custom_call.1} parent=1 // pred_check_branch
      %46 = sbr.rel (0) target = $region25
    $region24: #{tpu_custom_call.1} parent=1 // pred_region
      %s48 = ssub.s32 2048, 2048
      %49 = vsyncadd [#allocation7], %s48
      %s50 = sshll.u32 [#allocation8], 4
      %s51 = int_to_ptr.vmem [resolvable:$true] %s50
      %56 = dma.hbm_to_vmem [thread:$0]  %s5, 2048, %s51, [#allocation7], 128, 128, 8
    $region25: #{tpu_custom_call.1} parent=1 // pred_fallthru
      _
    // Predicated region
    $region26: #{tpu_custom_call.1} parent=1 // pred_check
      _
    $region27: #{tpu_custom_call.1} parent=1 // pred_check_branch
      %58 = sbr.rel (0) target = $region29
    $region28: #{tpu_custom_call.1} parent=1 // pred_region
      _
    $region29: #{tpu_custom_call.1} parent=1 // pred_fallthru
      _
    // Predicated region
    $region30: #{tpu_custom_call.1} parent=1 // pred_check
      _
    $region31: #{tpu_custom_call.1} parent=1 // pred_check_branch
      %60 = sbr.rel (0) target = $region33
    $region32: #{tpu_custom_call.1} parent=1 // pred_region
      %61 = dma.done [#allocation4], 128
    $region33: #{tpu_custom_call.1} parent=1 // pred_fallthru
      _
    // Predicated region
    $region34: #{tpu_custom_call.1} parent=1 // pred_check
      _
    $region35: #{tpu_custom_call.1} parent=1 // pred_check_branch
      %63 = sbr.rel (0) target = $region37
    $region36: #{tpu_custom_call.1} parent=1 // pred_region
      %64 = dma.done [#allocation7], 1024
    $region37: #{tpu_custom_call.1} parent=1 // pred_fallthru
      _
    // Predicated region
    $region38: #{tpu_custom_call.1} parent=1 // pred_check
      _
    $region39: #{tpu_custom_call.1} parent=1 // pred_check_branch
      %66 = sbr.rel (0) target = $region41
    $region40: #{tpu_custom_call.1} parent=1 // pred_region
      %67 = dma.done [#allocation7], 2048
    $region41: #{tpu_custom_call.1} parent=1 // pred_fallthru
      _
    %p69 = scmp.eq.s32.totalorder 0, 0
    // Predicated region
    $region42: #{tpu_custom_call.1} parent=1 // pred_check
      %p70 = pneg %p69
    $region43: #{tpu_custom_call.1} parent=1 // pred_check_branch
      %72 = sbr.rel (%p70) target = $region45
    $region44: #{tpu_custom_call.1} parent=1 // pred_region
      %v73 = vld [vmem:[#allocation3] sm:$0xf]
      %v74 = vld [vmem:[#allocation3 + $0x4] sm:$0xf]
      %v75 = vld [vmem:[#allocation6] sm:$0xf]
      %v76 = vld [vmem:[#allocation6 + $0x4] sm:$0xf]
      %v77 = vld [vmem:[#allocation6 + $0x8] sm:$0xf]
      %v78 = vld [vmem:[#allocation6 + $0xc] sm:$0xf]
      %v79 = vld [vmem:[#allocation6 + $0x10] sm:$0xf]
      %v80 = vld [vmem:[#allocation6 + $0x14] sm:$0xf]
      %v81 = vld [vmem:[#allocation6 + $0x18] sm:$0xf]
      %v82 = vld [vmem:[#allocation6 + $0x1c] sm:$0xf]
      %v83 = vld [vmem:[#allocation6 + $0x20] sm:$0xf]
      %v84 = vld [vmem:[#allocation6 + $0x24] sm:$0xf]
      %v85 = vld [vmem:[#allocation6 + $0x28] sm:$0xf]
      %v86 = vld [vmem:[#allocation6 + $0x2c] sm:$0xf]
      %v87 = vld [vmem:[#allocation6 + $0x30] sm:$0xf]
      %v88 = vld [vmem:[#allocation6 + $0x34] sm:$0xf]
      %v89 = vld [vmem:[#allocation6 + $0x38] sm:$0xf]
      %v90 = vld [vmem:[#allocation6 + $0x3c] sm:$0xf]
      %v91 = vld [vmem:[%s2] sm:$0x1]
      %v93 = vlaneseq
      %v94 = vshrl.u32 %v93, 7
      %v95 = vsub.s32 0, %v94
      %v96 = vrot.slane %v91, %v95
      %v100 = vunpack.c.l.b16 %v73
      %v101 = vunpack.c.l.b16 %v74
      %v102 = vpack.c.b16 %v101, %v100
      %v120 = vunpack.c.l.b16 %v75
      %v121 = vunpack.c.l.b16 %v76
      %v122 = vunpack.c.l.b16 %v77
      %v123 = vunpack.c.l.b16 %v78
      %v124 = vunpack.c.l.b16 %v79
      %v125 = vunpack.c.l.b16 %v80
      %v126 = vunpack.c.l.b16 %v81
      %v127 = vunpack.c.l.b16 %v82
      %v128 = vunpack.c.l.b16 %v83
      %v129 = vunpack.c.l.b16 %v84
      %v130 = vunpack.c.l.b16 %v85
      %v131 = vunpack.c.l.b16 %v86
      %v132 = vunpack.c.l.b16 %v87
      %v133 = vunpack.c.l.b16 %v88
      %v134 = vunpack.c.l.b16 %v89
      %v135 = vunpack.c.l.b16 %v90
      %v136 = vpack.c.b16 %v121, %v120
      %v137 = vpack.c.b16 %v123, %v122
      %v138 = vpack.c.b16 %v125, %v124
      %v139 = vpack.c.b16 %v127, %v126
      %v140 = vpack.c.b16 %v129, %v128
      %v141 = vpack.c.b16 %v131, %v130
      %v142 = vpack.c.b16 %v133, %v132
      %v143 = vpack.c.b16 %v135, %v134
      %152 = vmatprep.subr.bf16.mxu0 0
      %153 = vmatpush1.bf16.msra.mxu0 %v143
      %154 = vmatprep.subr.bf16.mxu0 0
      %155 = vmatpush1.bf16.msra.mxu0 %v142
      %156 = vmatprep.subr.bf16.mxu0 0
      %157 = vmatpush1.bf16.msra.mxu0 %v141
      %158 = vmatprep.subr.bf16.mxu0 0
      %159 = vmatpush1.bf16.msra.mxu0 %v140
      %160 = vmatprep.subr.bf16.mxu0 0
      %161 = vmatpush1.bf16.msra.mxu0 %v139
      %162 = vmatprep.subr.bf16.mxu0 0
      %163 = vmatpush1.bf16.msra.mxu0 %v138
      %164 = vmatprep.subr.bf16.mxu0 0
      %165 = vmatpush1.bf16.msra.mxu0 %v137
      %166 = vmatprep.subr.bf16.mxu0 0
      %167 = vmatpush1.bf16.msra.mxu0 %v136
      %168 = vmatprep.subr.bf16.mxu0 0
      %169 = vmatpush2.bf16.msra.mxu0 0
      %170 = vmatprep.subr.bf16.mxu0 0
      %171 = vmatpush2.bf16.msra.mxu0 0
      %172 = vmatprep.subr.bf16.mxu0 0
      %173 = vmatpush2.bf16.msra.mxu0 0
      %174 = vmatprep.subr.bf16.mxu0 0
      %175 = vmatpush2.bf16.msra.mxu0 0
      %176 = vmatprep.subr.bf16.mxu0 0
      %177 = vmatpush2.bf16.msra.mxu0 0
      %178 = vmatprep.subr.bf16.mxu0 0
      %179 = vmatpush2.bf16.msra.mxu0 0
      %180 = vmatprep.subr.bf16.mxu0 0
      %181 = vmatpush2.bf16.msra.mxu0 0
      %182 = vmatprep.subr.bf16.mxu0 0
      %183 = vmatpush2.bf16.msra.mxu0 0
      %184 = vmatprep.mubr.bf16.mxu0 0
      %185 = vmatmul.mubr.bf16.gmra.mxu0 %v102
      %v186 = vpop.f32.mrf.mxu0
      %v187 = vadd.f32 %v96, %v186
      %v188 = vpop.f32.mrf.mxu0
      %v189 = vpop.f32.mrf.mxu0
      %v190 = vadd.f32 %v96, %v189
      %v191 = vpop.f32.mrf.mxu0
      %192 = vdwg.mxu0
      %v193 = vmul.f32 %v187, 0.5
      %v194 = vmul.f32 %v190, 0.5
      %v195 = vmul.f32 %v187, 0.70710677
      %v196 = vmul.f32 %v190, 0.70710677
      %v197 = verf.f32.pop %v195
      %v198 = verf.f32.pop %v196
      %v199 = vadd.f32 %v197, 1.0
      %v200 = vadd.f32 %v198, 1.0
      %v201 = vmul.f32 %v193, %v199
      %v202 = vmul.f32 %v194, %v200
      %203 = vadd.xlane.f32.xlu0 %v201
      %v204 = vpop.xlane.xlu0 %203
      %205 = vadd.xlane.f32.xlu0 %v202
      %v206 = vpop.xlane.xlu0 %205
      %v207 = vrcp.pop 128.0
      %v208 = vmul.f32 %v204, %v207
      %v209 = vmul.f32 %v206, %v207
      %v210 = vsub.f32 %v201, %v208
      %v211 = vsub.f32 %v202, %v209
      %v212 = vmul.f32 %v210, %v210
      %v213 = vmul.f32 %v211, %v211
      %214 = vadd.xlane.f32.xlu0 %v212
      %v215 = vpop.xlane.xlu0 %214
      %216 = vadd.xlane.f32.xlu0 %v213
      %v217 = vpop.xlane.xlu0 %216
      %v218 = vmul.f32 %v215, %v207
      %v219 = vmul.f32 %v217, %v207
      %v220 = vadd.f32 %v218, 1e-12
      %v221 = vadd.f32 %v219, 1e-12
      %v222 = vrsqrt.pop %v220
      %v223 = vrsqrt.pop %v221
      %v224 = vld [vmem:[%s3] sm:$0x1]
      %v226 = vlaneseq
      %v227 = vshrl.u32 %v226, 7
      %v228 = vsub.s32 0, %v227
      %v229 = vrot.slane %v224, %v228
      %v231 = vmul.f32 %v229, %v222
      %v232 = vmul.f32 %v229, %v223
      %v233 = vmul.f32 %v210, %v231
      %v234 = vmul.f32 %v211, %v232
      %v235 = vld [vmem:[%s4] sm:$0x1]
      %v237 = vlaneseq
      %v238 = vshrl.u32 %v237, 7
      %v239 = vsub.s32 0, %v238
      %v240 = vrot.slane %v235, %v239
      %v242 = vadd.f32 %v233, %v240
      %v243 = vadd.f32 %v234, %v240
      %v244 = vpack.c.bf16 %v243, %v242
      %v246 = vunpack.c.l.b16 %v244
      %v247 = vunpack.c.h.b16 %v244
      %v248 = vpack.c.b16 %v246, %v246
      %v249 = vpack.c.b16 %v247, %v247
      %252 = vst [vmem:[#allocation2] sm:$0xf] %v248
      %253 = vst [vmem:[#allocation2 + $0x4] sm:$0xf] %v249
    $region45: #{tpu_custom_call.1} parent=1 // pred_fallthru
      _
    %v254 = vld [vmem:[#allocation2] sm:$0xf]
    %v255 = vld [vmem:[#allocation2 + $0x4] sm:$0xf]
    %v256 = vld [vmem:[#allocation8] sm:$0xff]
    %v257 = vld [vmem:[#allocation8 + $0x8] sm:$0xff]
    %v258 = vld [vmem:[#allocation8 + $0x10] sm:$0xff]
    %v259 = vld [vmem:[#allocation8 + $0x18] sm:$0xff]
    %v260 = vld [vmem:[#allocation8 + $0x20] sm:$0xff]
    %v261 = vld [vmem:[#allocation8 + $0x28] sm:$0xff]
    %v262 = vld [vmem:[#allocation8 + $0x30] sm:$0xff]
    %v263 = vld [vmem:[#allocation8 + $0x38] sm:$0xff]
    %v264 = vld [vmem:[#allocation8 + $0x40] sm:$0xff]
    %v265 = vld [vmem:[#allocation8 + $0x48] sm:$0xff]
    %v266 = vld [vmem:[#allocation8 + $0x50] sm:$0xff]
    %v267 = vld [vmem:[#allocation8 + $0x58] sm:$0xff]
    %v268 = vld [vmem:[#allocation8 + $0x60] sm:$0xff]
    %v269 = vld [vmem:[#allocation8 + $0x68] sm:$0xff]
    %v270 = vld [vmem:[#allocation8 + $0x70] sm:$0xff]
    %v271 = vld [vmem:[#allocation8 + $0x78] sm:$0xff]
    %v272 = vld [vmem:[%s6] sm:$0x3]
    %v274 = vlaneseq
    %v275 = vshrl.u32 %v274, 7
    %v276 = vsub.s32 0, %v275
    %v277 = vrot.slane %v272, %v276
    %v278 = vlaneseq
    %v279 = vshrl.u32 %v278, 7
    %v280 = vsub.s32 1, %v279
    %v281 = vrot.slane %v272, %v280
    %v286 = vunpack.c.l.b16 %v254
    %v287 = vunpack.c.l.b16 %v255
    %v288 = vpack.c.b16 %v287, %v286
    %v306 = vunpack.c.l.b16 %v256
    %v307 = vunpack.c.h.b16 %v256
    %v308 = vunpack.c.l.b16 %v257
    %v309 = vunpack.c.h.b16 %v257
    %v310 = vunpack.c.l.b16 %v258
    %v311 = vunpack.c.h.b16 %v258
    %v312 = vunpack.c.l.b16 %v259
    %v313 = vunpack.c.h.b16 %v259
    %v314 = vunpack.c.l.b16 %v260
    %v315 = vunpack.c.h.b16 %v260
    %v316 = vunpack.c.l.b16 %v261
    %v317 = vunpack.c.h.b16 %v261
    %v318 = vunpack.c.l.b16 %v262
    %v319 = vunpack.c.h.b16 %v262
    %v320 = vunpack.c.l.b16 %v263
    %v321 = vunpack.c.h.b16 %v263
    %v322 = vunpack.c.l.b16 %v264
    %v323 = vunpack.c.h.b16 %v264
    %v324 = vunpack.c.l.b16 %v265
    %v325 = vunpack.c.h.b16 %v265
    %v326 = vunpack.c.l.b16 %v266
    %v327 = vunpack.c.h.b16 %v266
    %v328 = vunpack.c.l.b16 %v267
    %v329 = vunpack.c.h.b16 %v267
    %v330 = vunpack.c.l.b16 %v268
    %v331 = vunpack.c.h.b16 %v268
    %v332 = vunpack.c.l.b16 %v269
    %v333 = vunpack.c.h.b16 %v269
    %v334 = vunpack.c.l.b16 %v270
    %v335 = vunpack.c.h.b16 %v270
    %v336 = vunpack.c.l.b16 %v271
    %v337 = vunpack.c.h.b16 %v271
    %v338 = vpack.c.b16 %v308, %v306
    %v339 = vpack.c.b16 %v309, %v307
    %v340 = vpack.c.b16 %v312, %v310
    %v341 = vpack.c.b16 %v313, %v311
    %v342 = vpack.c.b16 %v316, %v314
    %v343 = vpack.c.b16 %v317, %v315
    %v344 = vpack.c.b16 %v320, %v318
    %v345 = vpack.c.b16 %v321, %v319
    %v346 = vpack.c.b16 %v324, %v322
    %v347 = vpack.c.b16 %v325, %v323
    %v348 = vpack.c.b16 %v328, %v326
    %v349 = vpack.c.b16 %v329, %v327
    %v350 = vpack.c.b16 %v332, %v330
    %v351 = vpack.c.b16 %v333, %v331
    %v352 = vpack.c.b16 %v336, %v334
    %v353 = vpack.c.b16 %v337, %v335
    %370 = vmatprep.subr.bf16.mxu0 %v353
    %371 = vmatpush1.bf16.msra.mxu0 %v352
    %372 = vmatprep.subr.bf16.mxu0 %v351
    %373 = vmatpush1.bf16.msra.mxu0 %v350
    %374 = vmatprep.subr.bf16.mxu0 %v349
    %375 = vmatpush1.bf16.msra.mxu0 %v348
    %376 = vmatprep.subr.bf16.mxu0 %v347
    %377 = vmatpush1.bf16.msra.mxu0 %v346
    %378 = vmatprep.subr.bf16.mxu0 %v345
    %379 = vmatpush1.bf16.msra.mxu0 %v344
    %380 = vmatprep.subr.bf16.mxu0 %v343
    %381 = vmatpush1.bf16.msra.mxu0 %v342
    %382 = vmatprep.subr.bf16.mxu0 %v341
    %383 = vmatpush1.bf16.msra.mxu0 %v340
    %384 = vmatprep.subr.bf16.mxu0 %v339
    %385 = vmatpush1.bf16.msra.mxu0 %v338
    %386 = vmatprep.subr.bf16.mxu0 0
    %387 = vmatpush2.bf16.msra.mxu0 0
    %388 = vmatprep.subr.bf16.mxu0 0
    %389 = vmatpush2.bf16.msra.mxu0 0
    %390 = vmatprep.subr.bf16.mxu0 0
    %391 = vmatpush2.bf16.msra.mxu0 0
    %392 = vmatprep.subr.bf16.mxu0 0
    %393 = vmatpush2.bf16.msra.mxu0 0
    %394 = vmatprep.subr.bf16.mxu0 0
    %395 = vmatpush2.bf16.msra.mxu0 0
    %396 = vmatprep.subr.bf16.mxu0 0
    %397 = vmatpush2.bf16.msra.mxu0 0
    %398 = vmatprep.subr.bf16.mxu0 0
    %399 = vmatpush2.bf16.msra.mxu0 0
    %400 = vmatprep.subr.bf16.mxu0 0
    %401 = vmatpush2.bf16.msra.mxu0 0
    %402 = vmatprep.mubr.bf16.mxu0 0
    %403 = vmatmul.mubr.bf16.gmra.mxu0 %v288
    %v404 = vpop.f32.mrf.mxu0
    %v405 = vadd.f32 %v277, %v404
    %v406 = vpop.f32.mrf.mxu0
    %v407 = vadd.f32 %v281, %v406
    %v408 = vpop.f32.mrf.mxu0
    %v409 = vadd.f32 %v277, %v408
    %v410 = vpop.f32.mrf.mxu0
    %v411 = vadd.f32 %v281, %v410
    %412 = vdwg.mxu0
    %413 = vst [vmem:[#allocation9] sm:$0xff] %v405
    %414 = vst [vmem:[#allocation9 + $0x8] sm:$0xff] %v407
    %415 = vst [vmem:[#allocation9 + $0x10] sm:$0xff] %v409
    %416 = vst [vmem:[#allocation9 + $0x18] sm:$0xff] %v411
    // Predicated region
    $region46: #{tpu_custom_call.1} parent=1 // pred_check
      _
    $region47: #{tpu_custom_call.1} parent=1 // pred_check_branch
      %418 = sbr.rel (0) target = $region49
    $region48: #{tpu_custom_call.1} parent=1 // pred_region
      %s420 = ssub.s32 512, 512
      %421 = vsyncadd [#allocation5], %s420
      %s422 = sshll.u32 [#allocation9], 4
      %s423 = int_to_ptr.vmem [resolvable:$true] %s422
      %428 = dma.vmem_to_hbm [thread:$0]  %s423, 512, %s7, [#allocation5], 256, 256, 16
    $region49: #{tpu_custom_call.1} parent=1 // pred_fallthru
      _
    // Predicated region
    $region50: #{tpu_custom_call.1} parent=1 // pred_check
      _
    $region51: #{tpu_custom_call.1} parent=1 // pred_check_branch
      %430 = sbr.rel (0) target = $region53
    $region52: #{tpu_custom_call.1} parent=1 // pred_region
      %431 = dma.done [#allocation5], 512
    $region53: #{tpu_custom_call.1} parent=1 // pred_fallthru
      _
    %432 = vsyncpa [#allocation4], 1
    %433 = vsyncpa [#allocation7], 1
    %434 = vsyncpa [#allocation5], 1

</llo_original>
